<compile_context>
chip_gen: v6e
topology: v6e:2x2x1
jax: 0.10.0
libtpu: 0.0.40
codegen_flags: <defaults>
</compile_context>

<pallas_src>
import numpy as np
import jax
import jax.numpy as jnp
from jax.experimental import pallas as pl
from jax.experimental.pallas import tpu as pltpu


def convt_tanh_kernel(x_ref, w_ref, b_ref, o_ref):
    # x_ref: (Cin*H, W)            = (147, 6)   raw input image (metadata-only reshape)
    # w_ref: (kW*Cout*Hout, Cin*H) = (96, 147)  row-stacked packed tap weights [B0; B1]
    # b_ref: (Cout*Hout, 1)        = (48, 1)    per-output-row bias column
    # o_ref: (Cout*Hout, Wout)     = (48, 5)
    CoutHout, Wout = o_ref.shape
    kW = w_ref.shape[0] // CoutHout

    # Single MXU round trip: (96, 147) @ (147, 6) -> (96, 6) in f32.
    y = jnp.dot(w_ref[...], x_ref[...], preferred_element_type=jnp.float32)

    # Combine the kW taps: out[:, xo] = sum_j Y[j*CoutHout:(j+1)*CoutHout, xo + j]  (+ bias).
    acc = b_ref[...] + y[0:CoutHout, 0:Wout]
    for j in range(1, kW):                                   # static unroll (kW == 2)
        acc = acc + y[j * CoutHout:(j + 1) * CoutHout, j:j + Wout]

    o_ref[...] = jnp.tanh(acc)                               # EUP tanh, single vreg-ish tile


def pack_params(weight, bias, H, W, pad=1):
    """Offline host-side packing of ConvTranspose2d params into the row-stacked matmul form.

    weight: (Cin, Cout, kH, kW) -- PyTorch ConvTranspose2d layout.  bias: (Cout,).
    Valid only for stride=1 with pad == k-1 on both axes (this module's config); asserted.
    Returns Bstack (kW*Cout*Hout, Cin*H), bias column (Cout*Hout, 1), and (Cout, Hout, Wout).
    """
    weight = np.asarray(weight, np.float32)
    bias = np.asarray(bias, np.float32)
    Cin, Cout, kH, kW = weight.shape
    Hout = (H - 1) - 2 * pad + kH
    Wout = (W - 1) - 2 * pad + kW
    # With kH-1-pad == 0 the transposed conv is exactly a VALID cross-correlation of the
    # unpadded input with the spatially flipped weights (yo+i, xo+j never go out of bounds).
    assert kH - 1 - pad == 0 and kW - 1 - pad == 0, \
        "pack_params hard-codes stride=1, padding = kernel-1 (the module's configuration)"

    wf = weight[:, :, ::-1, ::-1]                            # spatial flip: (Cin, Cout, kH, kW)
    B = np.zeros((kW, Cout * Hout, Cin * H), np.float32)     # banded per-tap weight matrices
    rows = np.arange(Cout)[:, None] * Hout                   # (Cout, 1)
    cols = np.arange(Cin)[None, :] * H                       # (1, Cin)
    for j in range(kW):
        for yo in range(Hout):
            for i in range(kH):
                h = yo + i                                   # < H for this config
                B[j, rows + yo, cols + h] = wf[:, :, i, j].T  # (Cout, Cin) block
    Bstack = np.concatenate(list(B), axis=0)                 # (kW*Cout*Hout, Cin*H): one fused LHS
    b_col = np.repeat(bias, Hout).reshape(Cout * Hout, 1)    # b_col[o*Hout+yo] = bias[o]
    return jnp.asarray(Bstack), jnp.asarray(b_col), (Cout, Hout, Wout)


def conv_transpose_tanh(x_nchw, Bstack, b_col, out_chw):
    """x_nchw: (1, Cin, H, W) f32. Returns (1, Cout, Hout, Wout) = tanh(conv_transpose(x) + b)."""
    N, Cin, H, W = x_nchw.shape
    Cout, Hout, Wout = out_chw
    CinH = Cin * H
    CoutHout = Cout * Hout
    M2 = Bstack.shape[0]                                      # kW * CoutHout
    # N=1 per the module spec; for N>1 the right move is to fold batch into the lane axis
    # (RHS (CinH, N*W), output (CoutHout, N*Wout)) so stores become lane-dense.
    assert N == 1, "kernel instantiated for the module's batch size of 1"

    x2 = x_nchw.astype(jnp.float32).reshape(CinH, W)          # metadata-only reshape

    cost = pl.CostEstimate(
        flops=2 * M2 * CinH * W + 2 * CoutHout * Wout,        # one (96,147)@(147,6) + combines
        transcendentals=CoutHout * Wout,                      # tanh per output element
        bytes_accessed=4 * (CinH * W + M2 * CinH + CoutHout + CoutHout * Wout),
    )

    out = pl.pallas_call(
        convt_tanh_kernel,
        out_shape=jax.ShapeDtypeStruct((CoutHout, Wout), jnp.float32),
        in_specs=[
            pl.BlockSpec((CinH, W), lambda: (0, 0)),          # whole image slab, resident in VMEM
            pl.BlockSpec((M2, CinH), lambda: (0, 0)),         # packed stacked weights (resident)
            pl.BlockSpec((CoutHout, 1), lambda: (0, 0)),      # folded bias column
        ],
        out_specs=pl.BlockSpec((CoutHout, Wout), lambda: (0, 0)),
        cost_estimate=cost,
    )(x2, Bstack, b_col)

    return out.reshape(N, Cout, Hout, Wout)                   # metadata-only reshape -> NCHW


def reference_numpy(x, weight, bias):
    """Direct PyTorch-semantics ConvTranspose2d (stride=1, pad=1) + tanh, pure numpy loops."""
    N, Cin, H, W = x.shape
    _, Cout, kH, kW = weight.shape
    pad = 1
    Hout = (H - 1) - 2 * pad + kH
    Wout = (W - 1) - 2 * pad + kW
    out = np.zeros((N, Cout, Hout, Wout), dtype=np.float64)
    for n in range(N):
        for c in range(Cin):
            for o in range(Cout):
                for yi in range(H):
                    for xi in range(W):
                        for i in range(kH):
                            for j in range(kW):
                                yo = yi + i - pad
                                xo = xi + j - pad
                                if 0 <= yo < Hout and 0 <= xo < Wout:
                                    out[n, o, yo, xo] += x[n, c, yi, xi] * weight[c, o, i, j]
    out += bias.reshape(1, Cout, 1, 1)
    return np.tanh(out)


if __name__ == "__main__":
    key = jax.random.PRNGKey(0)
    kx, kw, kb = jax.random.split(key, 3)

    # Shapes from the module: x1 = torch.randn(1, 21, 7, 6);
    # ConvTranspose2d(21, 8, (2, 2), stride=1, padding=(1, 1)) -> output (1, 8, 6, 5).
    x = jax.random.normal(kx, (1, 21, 7, 6), dtype=jnp.float32)
    weight = jax.random.normal(kw, (21, 8, 2, 2), dtype=jnp.float32) * 0.1  # (Cin, Cout, kH, kW)
    bias = jax.random.normal(kb, (8,), dtype=jnp.float32) * 0.1

    Bstack, b_col, out_chw = pack_params(weight, bias, H=7, W=6)  # offline param packing
    out = conv_transpose_tanh(x, Bstack, b_col, out_chw)
    out = jax.block_until_ready(out)

    ref = reference_numpy(np.asarray(x), np.asarray(weight), np.asarray(bias))
    assert out.shape == (1, 8, 6, 5), out.shape
    np.testing.assert_allclose(np.asarray(out), ref, rtol=1e-4, atol=1e-4)

    print("KERNEL_OK")
</pallas_src>

<mosaic_0001>
module attributes {stable_mosaic.version = 11 : i64} {
  func.func @convt_tanh_kernel(%arg0: memref<147x6xf32, #tpu.memory_space<vmem>>, %arg1: memref<96x147xf32, #tpu.memory_space<vmem>>, %arg2: memref<48x1xf32, #tpu.memory_space<vmem>>, %arg3: memref<48x5xf32, #tpu.memory_space<vmem>>) attributes {dimension_semantics = [], scalar_prefetch = 0 : i64, scratch_operands = 0 : i64, tpu.core_type = #tpu.core_type<tc>} {
    %c0 = arith.constant 0 : index
    %c0_0 = arith.constant 0 : index
    %0 = vector.load %arg1[%c0, %c0_0] : memref<96x147xf32, #tpu.memory_space<vmem>>, vector<96x147xf32>
    %c0_1 = arith.constant 0 : index
    %c0_2 = arith.constant 0 : index
    %1 = vector.load %arg0[%c0_1, %c0_2] : memref<147x6xf32, #tpu.memory_space<vmem>>, vector<147x6xf32>
    %cst = arith.constant dense<0.000000e+00> : vector<96x6xf32>
    %2 = tpu.matmul %0, %1, %cst {dimension_numbers = #tpu.dot_dimension_numbers<[1], [0], [0], [1], [0, 0, 1, 1], [], []>} : vector<96x147xf32>, vector<147x6xf32>, vector<96x6xf32> -> vector<96x6xf32>
    %c0_3 = arith.constant 0 : index
    %c0_4 = arith.constant 0 : index
    %3 = vector.load %arg2[%c0_3, %c0_4] : memref<48x1xf32, #tpu.memory_space<vmem>>, vector<48x1xf32>
    %4 = vector.extract_strided_slice %2 {offsets = [0, 0], sizes = [48, 5], strides = [1, 1]} : vector<96x6xf32> to vector<48x5xf32>
    %5 = vector.broadcast %3 : vector<48x1xf32> to vector<48x5xf32>
    %6 = arith.addf %5, %4 : vector<48x5xf32>
    %7 = vector.extract_strided_slice %2 {offsets = [48, 1], sizes = [48, 5], strides = [1, 1]} : vector<96x6xf32> to vector<48x5xf32>
    %8 = arith.addf %6, %7 : vector<48x5xf32>
    %9 = math.tanh %8 : vector<48x5xf32>
    %c0_5 = arith.constant 0 : index
    %c0_6 = arith.constant 0 : index
    %10 = vector.load %arg3[%c0_5, %c0_6] : memref<48x5xf32, #tpu.memory_space<vmem>>, vector<48x5xf32>
    tpu.vector_store %arg3[%c0_5, %c0_6], %9 {strides = array<i32>} : memref<48x5xf32, #tpu.memory_space<vmem>>, vector<48x5xf32>,
    return
  }
}

</mosaic_0001>

<llo_original>
// kernel: tpu_custom_call.1
$region0: #{tpu_custom_call.1}
  #allocation0 [shape = 'u32[]', space=smem, size = 0x4, offset = 0x4, fixed_abs, tag = 'smem constant byte address 0x4 - core index']
  #allocation1 [shape = 'u32[144,128]{1,0:T(1,128)}', space=vmem, size = 0x12000, scoped, tag = 'internal scratch']
  %s0 = inlined_call_operand.vmem [shape: f32[147,6], index: 0, kind: input, shape index: {}]
  %s1 = inlined_call_operand.vmem [shape: f32[96,147], index: 1, kind: input, shape index: {}]
  %s2 = inlined_call_operand.vmem [shape: f32[48,1], index: 2, kind: input, shape index: {}]
  %s3 = inlined_call_operand.vmem [shape: f32[48,5], index: 3, kind: output, shape index: {}]
  %s4 = sld [smem:[#allocation0]]
  $region22: #{tpu_custom_call.1} parent=0
    _
  %s6 = ssub.s32 1, %s4
  %s7 = scalar_select 0, %s6, %s4
  // Predicated region
  $region2: #{tpu_custom_call.1} parent=0 // pred_check
    _
  $region3: #{tpu_custom_call.1} parent=0 // pred_check_branch
    %9 = sbr.rel (0) target = $region5
  $region4: #{tpu_custom_call.1} parent=0 // pred_region
    _
  $region5: #{tpu_custom_call.1} parent=0 // pred_fallthru
    _
  // Predicated region
  $region6: #{tpu_custom_call.1} parent=0 // pred_check
    _
  $region7: #{tpu_custom_call.1} parent=0 // pred_check_branch
    %11 = sbr.rel (0) target = $region9
  $region8: #{tpu_custom_call.1} parent=0 // pred_region
    _
  $region9: #{tpu_custom_call.1} parent=0 // pred_fallthru
    _
  // Predicated region
  $region10: #{tpu_custom_call.1} parent=0 // pred_check
    _
  $region11: #{tpu_custom_call.1} parent=0 // pred_check_branch
    %13 = sbr.rel (0) target = $region13
  $region12: #{tpu_custom_call.1} parent=0 // pred_region
    _
  $region13: #{tpu_custom_call.1} parent=0 // pred_fallthru
    _
  %v14 = vld [vmem:[%s1] sm:$0xff]
  %v15 = vld [vmem:[%s1 + $0x8] sm:$0xff]
  %v16 = vld [vmem:[%s1 + $0x10] sm:$0xff]
  %v17 = vld [vmem:[%s1 + $0x18] sm:$0xff]
  %v18 = vld [vmem:[%s1 + $0x20] sm:$0xff]
  %v19 = vld [vmem:[%s1 + $0x28] sm:$0xff]
  %v20 = vld [vmem:[%s1 + $0x30] sm:$0xff]
  %v21 = vld [vmem:[%s1 + $0x38] sm:$0xff]
  %v22 = vld [vmem:[%s1 + $0x40] sm:$0xff]
  %v23 = vld [vmem:[%s1 + $0x48] sm:$0xff]
  %v24 = vld [vmem:[%s1 + $0x50] sm:$0xff]
  %v25 = vld [vmem:[%s1 + $0x58] sm:$0xff]
  %v26 = vld [vmem:[%s1 + $0x60] sm:$0xff]
  %v27 = vld [vmem:[%s1 + $0x68] sm:$0xff]
  %v28 = vld [vmem:[%s1 + $0x70] sm:$0xff]
  %v29 = vld [vmem:[%s1 + $0x78] sm:$0xff]
  %v30 = vld [vmem:[%s1 + $0x80] sm:$0xff]
  %v31 = vld [vmem:[%s1 + $0x88] sm:$0xff]
  %v32 = vld [vmem:[%s1 + $0x90] sm:$0xff]
  %v33 = vld [vmem:[%s1 + $0x98] sm:$0xff]
  %v34 = vld [vmem:[%s1 + $0xa0] sm:$0xff]
  %v35 = vld [vmem:[%s1 + $0xa8] sm:$0xff]
  %v36 = vld [vmem:[%s1 + $0xb0] sm:$0xff]
  %v37 = vld [vmem:[%s1 + $0xb8] sm:$0xff]
  %v38 = vld [vmem:[%s0] sm:$0xff]
  %v39 = vld [vmem:[%s0 + $0x8] sm:$0xff]
  %v40 = vld [vmem:[%s0 + $0x10] sm:$0xff]
  %v41 = vld [vmem:[%s0 + $0x18] sm:$0xff]
  %v42 = vld [vmem:[%s0 + $0x20] sm:$0xff]
  %v43 = vld [vmem:[%s0 + $0x28] sm:$0xff]
  %v44 = vld [vmem:[%s0 + $0x30] sm:$0xff]
  %v45 = vld [vmem:[%s0 + $0x38] sm:$0xff]
  %v46 = vld [vmem:[%s0 + $0x40] sm:$0xff]
  %v47 = vld [vmem:[%s0 + $0x48] sm:$0xff]
  %v48 = vld [vmem:[%s0 + $0x50] sm:$0xff]
  %v49 = vld [vmem:[%s0 + $0x58] sm:$0xff]
  %v50 = vld [vmem:[%s0 + $0x60] sm:$0xff]
  %v51 = vld [vmem:[%s0 + $0x68] sm:$0xff]
  %v52 = vld [vmem:[%s0 + $0x70] sm:$0xff]
  %v53 = vld [vmem:[%s0 + $0x78] sm:$0xff]
  %v54 = vld [vmem:[%s0 + $0x80] sm:$0xff]
  %v55 = vld [vmem:[%s0 + $0x88] sm:$0xff]
  %v56 = vld [vmem:[%s0 + $0x90] sm:$0x7]
  %vm57 = vcmask 154624
  %v59 = vsel %vm57, %v15, 0
  %v62 = vsel %vm57, %v17, 0
  %v65 = vsel %vm57, %v19, 0
  %v68 = vsel %vm57, %v21, 0
  %v71 = vsel %vm57, %v23, 0
  %v74 = vsel %vm57, %v25, 0
  %v77 = vsel %vm57, %v27, 0
  %v80 = vsel %vm57, %v29, 0
  %v83 = vsel %vm57, %v31, 0
  %v86 = vsel %vm57, %v33, 0
  %v89 = vsel %vm57, %v35, 0
  %v92 = vsel %vm57, %v37, 0
  %vm94 = vcmask 1042432
  %v96 = vsel %vm94, %v56, 0
  %98 = vmatprep.subr.mxu0 0.0
  %99 = vmatpush1.msra.mxu0 %v53
  %100 = vmatprep.subr.mxu0 0.0
  %101 = vmatpush1.msra.mxu0 %v52
  %102 = vmatprep.subr.mxu0 0.0
  %103 = vmatpush1.msra.mxu0 %v51
  %104 = vmatprep.subr.mxu0 0.0
  %105 = vmatpush1.msra.mxu0 %v50
  %106 = vmatprep.subr.mxu0 0.0
  %107 = vmatpush1.msra.mxu0 %v49
  %108 = vmatprep.subr.mxu0 0.0
  %109 = vmatpush1.msra.mxu0 %v48
  %110 = vmatprep.subr.mxu0 0.0
  %111 = vmatpush1.msra.mxu0 %v47
  %112 = vmatprep.subr.mxu0 0.0
  %113 = vmatpush1.msra.mxu0 %v46
  %114 = vmatprep.subr.mxu0 0.0
  %115 = vmatpush1.msra.mxu0 %v45
  %116 = vmatprep.subr.mxu0 0.0
  %117 = vmatpush1.msra.mxu0 %v44
  %118 = vmatprep.subr.mxu0 0.0
  %119 = vmatpush1.msra.mxu0 %v43
  %120 = vmatprep.subr.mxu0 0.0
  %121 = vmatpush1.msra.mxu0 %v42
  %122 = vmatprep.subr.mxu0 0.0
  %123 = vmatpush1.msra.mxu0 %v41
  %124 = vmatprep.subr.mxu0 0.0
  %125 = vmatpush1.msra.mxu0 %v40
  %126 = vmatprep.subr.mxu0 0.0
  %127 = vmatpush1.msra.mxu0 %v39
  %128 = vmatprep.subr.mxu0 0.0
  %129 = vmatpush1.msra.mxu0 %v38
  %130 = vmatprep.subr.mxu0 0.0
  %131 = vmatpush2.msra.mxu0 0.0
  %132 = vmatprep.subr.mxu0 0.0
  %133 = vmatpush2.msra.mxu0 0.0
  %134 = vmatprep.subr.mxu0 0.0
  %135 = vmatpush2.msra.mxu0 0.0
  %136 = vmatprep.subr.mxu0 0.0
  %137 = vmatpush2.msra.mxu0 0.0
  %138 = vmatprep.subr.mxu0 0.0
  %139 = vmatpush2.msra.mxu0 0.0
  %140 = vmatprep.subr.mxu0 0.0
  %141 = vmatpush2.msra.mxu0 0.0
  %142 = vmatprep.subr.mxu0 0.0
  %143 = vmatpush2.msra.mxu0 0.0
  %144 = vmatprep.subr.mxu0 0.0
  %145 = vmatpush2.msra.mxu0 0.0
  %146 = vmatprep.subr.mxu0 0.0
  %147 = vmatpush2.msra.mxu0 0.0
  %148 = vmatprep.subr.mxu0 0.0
  %149 = vmatpush2.msra.mxu0 0.0
  %150 = vmatprep.subr.mxu0 0.0
  %151 = vmatpush2.msra.mxu0 0.0
  %152 = vmatprep.subr.mxu0 0.0
  %153 = vmatpush2.msra.mxu0 0.0
  %154 = vmatprep.subr.mxu0 0.0
  %155 = vmatpush2.msra.mxu0 0.0
  %156 = vmatprep.subr.mxu0 0.0
  %157 = vmatpush2.msra.mxu0 %v96
  %158 = vmatprep.subr.mxu0 0.0
  %159 = vmatpush2.msra.mxu0 %v55
  %160 = vmatprep.subr.mxu0 0.0
  %161 = vmatpush2.msra.mxu0 %v54
  %162 = vmatprep.mubr.f32.mxu0 %v59
  %163 = vmatmul.mubr.f32.gmra.mxu0 %v14
  %v164 = vpop.f32.mrf.mxu0
  %v165 = vadd.f32 0.0, %v164
  %v166 = vpop.f32.mrf.mxu0
  %167 = vmatprep.mubr.f32.mxu0 %v62
  %168 = vmatmul.mubr.f32.gmra.mxu0 %v16
  %v169 = vpop.f32.mrf.mxu0
  %v170 = vadd.f32 0.0, %v169
  %v171 = vpop.f32.mrf.mxu0
  %172 = vmatprep.mubr.f32.mxu0 %v65
  %173 = vmatmul.mubr.f32.gmra.mxu0 %v18
  %v174 = vpop.f32.mrf.mxu0
  %v175 = vadd.f32 0.0, %v174
  %v176 = vpop.f32.mrf.mxu0
  %177 = vmatprep.mubr.f32.mxu0 %v68
  %178 = vmatmul.mubr.f32.gmra.mxu0 %v20
  %v179 = vpop.f32.mrf.mxu0
  %v180 = vadd.f32 0.0, %v179
  %v181 = vpop.f32.mrf.mxu0
  %182 = vmatprep.mubr.f32.mxu0 %v71
  %183 = vmatmul.mubr.f32.gmra.mxu0 %v22
  %v184 = vpop.f32.mrf.mxu0
  %v185 = vadd.f32 0.0, %v184
  %v186 = vpop.f32.mrf.mxu0
  %187 = vmatprep.mubr.f32.mxu0 %v74
  %188 = vmatmul.mubr.f32.gmra.mxu0 %v24
  %v189 = vpop.f32.mrf.mxu0
  %v190 = vadd.f32 0.0, %v189
  %v191 = vpop.f32.mrf.mxu0
  %192 = vmatprep.mubr.f32.mxu0 %v77
  %193 = vmatmul.mubr.f32.gmra.mxu0 %v26
  %v194 = vpop.f32.mrf.mxu0
  %v195 = vadd.f32 0.0, %v194
  %v196 = vpop.f32.mrf.mxu0
  %197 = vmatprep.mubr.f32.mxu0 %v80
  %198 = vmatmul.mubr.f32.gmra.mxu0 %v28
  %v199 = vpop.f32.mrf.mxu0
  %v200 = vadd.f32 0.0, %v199
  %v201 = vpop.f32.mrf.mxu0
  %202 = vmatprep.mubr.f32.mxu0 %v83
  %203 = vmatmul.mubr.f32.gmra.mxu0 %v30
  %v204 = vpop.f32.mrf.mxu0
  %v205 = vadd.f32 0.0, %v204
  %v206 = vpop.f32.mrf.mxu0
  %207 = vmatprep.mubr.f32.mxu0 %v86
  %208 = vmatmul.mubr.f32.gmra.mxu0 %v32
  %v209 = vpop.f32.mrf.mxu0
  %v210 = vadd.f32 0.0, %v209
  %v211 = vpop.f32.mrf.mxu0
  %212 = vmatprep.mubr.f32.mxu0 %v89
  %213 = vmatmul.mubr.f32.gmra.mxu0 %v34
  %v214 = vpop.f32.mrf.mxu0
  %v215 = vadd.f32 0.0, %v214
  %v216 = vpop.f32.mrf.mxu0
  %217 = vmatprep.mubr.f32.mxu0 %v92
  %218 = vmatmul.mubr.f32.gmra.mxu0 %v36
  %v219 = vpop.f32.mrf.mxu0
  %v220 = vadd.f32 0.0, %v219
  %v221 = vpop.f32.mrf.mxu0
  %222 = vdwg.mxu0
  %v223 = vld [vmem:[%s2] sm:$0xff]
  %v224 = vld [vmem:[%s2 + $0x8] sm:$0xff]
  %v225 = vld [vmem:[%s2 + $0x10] sm:$0xff]
  %v226 = vld [vmem:[%s2 + $0x18] sm:$0xff]
  %v227 = vld [vmem:[%s2 + $0x20] sm:$0xff]
  %v228 = vld [vmem:[%s2 + $0x28] sm:$0xff]
  %230 = vset.pattern.permute.xlu0 0
  %231 = vperm.xlu0 %230, %v223
  %v232 = vpop.permute.xlu0 %231
  %235 = vset.pattern.permute.xlu0 0
  %236 = vperm.xlu0 %235, %v224
  %v237 = vpop.permute.xlu0 %236
  %240 = vset.pattern.permute.xlu0 0
  %241 = vperm.xlu0 %240, %v225
  %v242 = vpop.permute.xlu0 %241
  %245 = vset.pattern.permute.xlu0 0
  %246 = vperm.xlu0 %245, %v226
  %v247 = vpop.permute.xlu0 %246
  %250 = vset.pattern.permute.xlu0 0
  %251 = vperm.xlu0 %250, %v227
  %v252 = vpop.permute.xlu0 %251
  %255 = vset.pattern.permute.xlu0 0
  %256 = vperm.xlu0 %255, %v228
  %v257 = vpop.permute.xlu0 %256
  %v259 = vadd.f32 %v232, %v165
  %v260 = vadd.f32 %v237, %v170
  %v261 = vadd.f32 %v242, %v175
  %v262 = vadd.f32 %v247, %v180
  %v263 = vadd.f32 %v252, %v185
  %v264 = vadd.f32 %v257, %v190
  %271 = vrot.lane.b32.xlu0 %v195, 127
  %v272 = vpop.permute.xlu0 %271
  %273 = vrot.lane.b32.xlu0 %v200, 127
  %v274 = vpop.permute.xlu0 %273
  %275 = vrot.lane.b32.xlu0 %v205, 127
  %v276 = vpop.permute.xlu0 %275
  %277 = vrot.lane.b32.xlu0 %v210, 127
  %v278 = vpop.permute.xlu0 %277
  %279 = vrot.lane.b32.xlu0 %v215, 127
  %v280 = vpop.permute.xlu0 %279
  %281 = vrot.lane.b32.xlu0 %v220, 127
  %v282 = vpop.permute.xlu0 %281
  %v289 = vadd.f32 %v259, %v272
  %v290 = vadd.f32 %v260, %v274
  %v291 = vadd.f32 %v261, %v276
  %v292 = vadd.f32 %v262, %v278
  %v293 = vadd.f32 %v263, %v280
  %v294 = vadd.f32 %v264, %v282
  %v295 = vtanh.pop %v289
  %v296 = vtanh.pop %v290
  %v297 = vtanh.pop %v291
  %v298 = vtanh.pop %v292
  %v299 = vtanh.pop %v293
  %v300 = vtanh.pop %v294
  %vm301 = vcmask 39936
  %302 = vst.msk [vmem:[%s3] sm:$0xff] %vm301, %v295
  %303 = vst.msk [vmem:[%s3 + $0x8] sm:$0xff] %vm301, %v296
  %304 = vst.msk [vmem:[%s3 + $0x10] sm:$0xff] %vm301, %v297
  %305 = vst.msk [vmem:[%s3 + $0x18] sm:$0xff] %vm301, %v298
  %306 = vst.msk [vmem:[%s3 + $0x20] sm:$0xff] %vm301, %v299
  %307 = vst.msk [vmem:[%s3 + $0x28] sm:$0xff] %vm301, %v300
  // Predicated region
  $region14: #{tpu_custom_call.1} parent=0 // pred_check
    _
  $region15: #{tpu_custom_call.1} parent=0 // pred_check_branch
    %309 = sbr.rel (0) target = $region17
  $region16: #{tpu_custom_call.1} parent=0 // pred_region
    _
  $region17: #{tpu_custom_call.1} parent=0 // pred_fallthru
    _
  // Predicated region
  $region18: #{tpu_custom_call.1} parent=0 // pred_check
    _
  $region19: #{tpu_custom_call.1} parent=0 // pred_check_branch
    %311 = sbr.rel (0) target = $region21
  $region20: #{tpu_custom_call.1} parent=0 // pred_region
    _
  $region21: #{tpu_custom_call.1} parent=0 // pred_fallthru
    _

</llo_original>
